<compile_context>
chip_gen: v7x
topology: tpu7x:2x2x1
jax: 0.10.0
libtpu: 0.0.40
codegen_flags: <defaults>
</compile_context>

<pallas_src>
import math

import jax
import jax.numpy as jnp
from jax.experimental import pallas as pl
from jax.experimental.pallas import tpu as pltpu


# ----------------------------------------------------------------------------
# Init-time buffer construction (matches the PyTorch __init__ exactly).
# ----------------------------------------------------------------------------
def make_pos(dim, width, height, dtype=jnp.float32):
    """Deterministic positional-encoding buffer, identical to the PyTorch init."""
    assert dim % 4 == 0
    half = dim // 2
    d = jnp.exp(jnp.arange(0.0, half, 2.0) * -(math.log(10000.0) / half))  # (half//2,)
    pos_w = jnp.arange(0.0, width)[:, None]    # (W, 1)
    pos_h = jnp.arange(0.0, height)[:, None]   # (H, 1)

    sin_w = jnp.sin(pos_w * d).T[:, None, :]   # (half//2, 1, W)
    cos_w = jnp.cos(pos_w * d).T[:, None, :]   # (half//2, 1, W)
    sin_h = jnp.sin(pos_h * d).T[:, :, None]   # (half//2, H, 1)
    cos_h = jnp.cos(pos_h * d).T[:, :, None]   # (half//2, H, 1)

    q = half // 2
    pos = jnp.zeros((1, dim, height, width), dtype)
    pos = pos.at[0, 0:half:2].set(jnp.broadcast_to(sin_w, (q, height, width)))
    pos = pos.at[0, 1:half:2].set(jnp.broadcast_to(cos_w, (q, height, width)))
    pos = pos.at[0, half + 0::2].set(jnp.broadcast_to(sin_h, (q, height, width)))
    pos = pos.at[0, half + 1::2].set(jnp.broadcast_to(cos_h, (q, height, width)))
    return pos


def prepare_pos(pos, H, W):
    """One-time (init-time) prep: restrict the buffer to the (H, W) extents."""
    return pos[:, :, :H, :W]


# ----------------------------------------------------------------------------
# Kernel: pure VPU elementwise add on VMEM tiles.
# ----------------------------------------------------------------------------
def _add_pos_kernel(x_ref, pos_ref, o_ref):
    # x/out blocks: (b_block, r_block, L); pos block: (1, r_block, L).
    # The add broadcasts pos over the leading (batch) block dim on the VPU.
    # pos keeps default double buffering: under the _pick_blocks budget its
    # buffers are already accounted for, so pl.Buffered(1) would buy ~nothing.
    o_ref[...] = (x_ref[...] + pos_ref[...]).astype(o_ref.dtype)


# ----------------------------------------------------------------------------
# Tiling / budget selection.
# ----------------------------------------------------------------------------
_LANE_OPTS = (2048, 1024, 512, 256, 128)


def _vmem_budget_bytes():
    """Generation-aware scoped-VMEM budget (bytes).

    v5e/v6e: 128 MiB physical -> ask ~96 MiB.  v7x: 64 MiB per TC -> ~48 MiB.
    Falls back to the conservative 32 MiB known to compile everywhere if the
    TPU info query is unavailable.
    """
    try:
        phys = int(pltpu.get_tpu_info().vmem_capacity_bytes)
        if phys > 0:
            return min((phys * 3) // 4, 96 * 1024 * 1024)
    except Exception:
        pass
    return 32 * 1024 * 1024


def _largest_divisor_leq(n, cap):
    cap = max(1, min(n, cap))
    for d in range(cap, 0, -1):
        if n % d == 0:
            return d
    return 1


def _pick_blocks(B, F, itemsize, vmem_limit):
    """Choose (L, R, r_block, b_block) for the flattened (B, F) problem.

    F (a multiple of 128) is viewed as (R, L) with L on lanes.  x/out blocks
    are (b_block, r_block, L); pos blocks are (1, r_block, L).  Target block
    bytes ~= vmem_limit / 8 so x + out double-buffered plus the pos buffers
    (<= 6 block-sized buffers total) fit with headroom.
    """
    assert F % 128 == 0
    # Lane width: prefer a factorization with R >= 8 so sublanes are dense too.
    L = None
    for cand in _LANE_OPTS:
        if F % cand == 0 and F // cand >= 8:
            L = cand
            break
    if L is None:
        L = next(c for c in _LANE_OPTS if F % c == 0)
    R = F // L

    target_bytes = max(1 << 20, vmem_limit // 8)
    row_bytes = L * itemsize
    max_rows = max(1, target_bytes // row_bytes)

    # Rows per block: full R if it fits; else the largest divisor of R that is
    # a multiple of 8 (identical, unmasked steps); else a plain multiple of 8
    # with a ragged (masked) final block as a last resort.
    if R <= max_rows:
        r_block = R
    else:
        r_block = 0
        cap8 = (max_rows // 8) * 8
        for d in range(cap8, 0, -8):
            if R % d == 0:
                r_block = d
                break
        if r_block == 0:
            r_block = max(8, cap8)

    # Batch elements per block: largest divisor of B that keeps the block under
    # the byte target (exact division -> no ragged batch tail).
    max_b = max(1, target_bytes // (r_block * row_bytes))
    b_block = _largest_divisor_leq(B, max_b)

    # Keep >= 2 grid steps so v7x's two TensorCores both get work.
    if pl.cdiv(R, r_block) * (B // b_block) == 1:
        if B >= 2:
            b_block = _largest_divisor_leq(B, B // 2)
        elif R >= 16:
            cap8 = ((R // 2) // 8) * 8
            for d in range(cap8, 0, -8):
                if R % d == 0:
                    r_block = d
                    break

    return L, R, r_block, b_block


# ----------------------------------------------------------------------------
# Lane-dense batched add (F must be a multiple of 128).
# ----------------------------------------------------------------------------
def _add_pos_lane_dense(x2, pos2, *, donate_x=False):
    """x2: (B, F), pos2: (1, F) with F % 128 == 0.  Returns x2 + pos2."""
    B, F = x2.shape
    itemsize = jnp.dtype(x2.dtype).itemsize

    vmem_limit = _vmem_budget_bytes()
    L, R, r_block, b_block = _pick_blocks(B, F, itemsize, vmem_limit)
    n_r = pl.cdiv(R, r_block)
    n_b = B // b_block

    # Row-major regrouping reshapes: free (no data movement).
    x3 = x2.reshape(B, R, L)
    p3 = pos2.reshape(1, R, L)

    extra = {"input_output_aliases": {0: 0}} if donate_x else {}

    out3 = pl.pallas_call(
        _add_pos_kernel,
        out_shape=jax.ShapeDtypeStruct((B, R, L), x2.dtype),
        grid_spec=pltpu.PrefetchScalarGridSpec(
            num_scalar_prefetch=0,
            # Feature chunk OUTER, batch block INNER: pos's block index only
            # changes on the outer axis, so each pos chunk is DMA'd once and
            # stays VMEM-resident across all inner (batch-block) steps.
            grid=(n_r, n_b),
            in_specs=[
                pl.BlockSpec((b_block, r_block, L), lambda r, b: (b, r, 0)),  # x
                pl.BlockSpec((1, r_block, L), lambda r, b: (0, r, 0)),        # pos
            ],
            out_specs=pl.BlockSpec((b_block, r_block, L), lambda r, b: (b, r, 0)),
        ),
        compiler_params=pltpu.CompilerParams(
            dimension_semantics=("parallel", "parallel"),
            vmem_limit_bytes=vmem_limit,
        ),
        cost_estimate=pl.CostEstimate(
            flops=B * F,
            transcendentals=0,
            bytes_accessed=(2 * B * F + F) * itemsize,  # x read, out write, pos once
        ),
        **extra,
    )(x3, p3)
    return out3.reshape(B, F)


# ----------------------------------------------------------------------------
# Forward: x + pos (broadcast over batch).
# ----------------------------------------------------------------------------
def position_encode_2d(x, pos_hw, *, donate_x=False):
    """Forward pass of PositionEncode2D.

    x:        (B, C, H, W)
    pos_hw:   (1, C, H, W) -- buffer already restricted to (H, W) at init time
              (see prepare_pos; done once, not per call).
    donate_x: if True, alias x's HBM buffer with the output
              (input_output_aliases); only set when the caller donates x.
    """
    B, C, H, W = x.shape
    assert pos_hw.shape == (1, C, H, W), (pos_hw.shape, (1, C, H, W))
    if pos_hw.dtype != x.dtype:
        pos_hw = pos_hw.astype(x.dtype)
    F = C * H * W

    x2 = x.reshape(B, F)
    p2 = pos_hw.reshape(1, F)

    # Lane-dense everywhere: if F is not a multiple of 128, pad the flattened
    # feature axis up (adds < 128 elements of traffic per row) instead of a
    # W-on-lanes slab layout that wastes most of every vreg and emits masked
    # partial stores.
    pad = (-F) % 128
    if pad:
        x2 = jnp.pad(x2, ((0, 0), (0, pad)))
        p2 = jnp.pad(p2, ((0, 0), (0, pad)))

    out2 = _add_pos_lane_dense(x2, p2, donate_x=donate_x)
    if pad:
        out2 = out2[:, :F]
    return out2.reshape(B, C, H, W)


if __name__ == "__main__":
    # Module config: dim (=C) must be divisible by 4.
    B, C, H, W = 2, 4, 16, 16
    buf_w, buf_h = 16, 16  # buffer extents (>= H, W)

    root = jax.random.PRNGKey(0)
    k1, k2, k3 = jax.random.split(root, 3)

    pos = make_pos(C, buf_w, buf_h)          # init-time buffer
    pos_hw = prepare_pos(pos, H, W)          # init-time slice

    # Check 1: primary shape (lane-dense path, no padding).
    x1 = jax.random.normal(k1, (B, C, H, W), dtype=jnp.float32)
    out1 = position_encode_2d(x1, pos_hw)
    jax.block_until_ready(out1)
    ref1 = x1 + pos[:, :, :H, :W]
    assert out1.shape == (B, C, H, W)
    assert jnp.allclose(out1, ref1, atol=1e-6), "mismatch vs reference (check 1)"

    # Check 2: larger batch -> b_block > 1 (exercises in-kernel pos broadcast).
    B2 = 8
    x2 = jax.random.normal(k2, (B2, C, H, W), dtype=jnp.float32)
    out2 = position_encode_2d(x2, pos_hw)
    jax.block_until_ready(out2)
    assert jnp.allclose(out2, x2 + pos[:, :, :H, :W], atol=1e-6), \
        "mismatch vs reference (check 2)"

    # Check 3: W=7 -> C*H*W not a multiple of 128 (exercises pad-to-128 path).
    H3, W3 = 16, 7
    x3 = jax.random.normal(k3, (B, C, H3, W3), dtype=jnp.float32)
    pos_hw3 = prepare_pos(pos, H3, W3)
    out3 = position_encode_2d(x3, pos_hw3)
    jax.block_until_ready(out3)
    assert jnp.allclose(out3, x3 + pos[:, :, :H3, :W3], atol=1e-6), \
        "mismatch vs reference (check 3)"

    print("KERNEL_OK")
</pallas_src>

<mosaic_0001>
module attributes {stable_mosaic.version = 11 : i64} {
  func.func @_add_pos_kernel(%arg0: i32, %arg1: i32, %arg2: memref<1x8x128xf32, #tpu.memory_space<vmem>>, %arg3: memref<1x8x128xf32, #tpu.memory_space<vmem>>, %arg4: memref<1x8x128xf32, #tpu.memory_space<vmem>>) attributes {dimension_semantics = [#tpu.dimension_semantics<parallel>, #tpu.dimension_semantics<parallel>], iteration_bounds = array<i64: 1, 2>, scalar_prefetch = 0 : i64, scratch_operands = 0 : i64, tpu.core_type = #tpu.core_type<tc>, window_params = [{transform_indices = @transform_0, window_bounds = array<i64: 1, 8, 128>}, {transform_indices = @transform_1, window_bounds = array<i64: 1, 8, 128>}, {transform_indices = @transform_2, window_bounds = array<i64: 1, 8, 128>}]} {
    %c0 = arith.constant 0 : index
    %c0_0 = arith.constant 0 : index
    %c0_1 = arith.constant 0 : index
    %0 = vector.load %arg2[%c0, %c0_0, %c0_1] : memref<1x8x128xf32, #tpu.memory_space<vmem>>, vector<1x8x128xf32>
    %c0_2 = arith.constant 0 : index
    %c0_3 = arith.constant 0 : index
    %c0_4 = arith.constant 0 : index
    %1 = vector.load %arg3[%c0_2, %c0_3, %c0_4] : memref<1x8x128xf32, #tpu.memory_space<vmem>>, vector<1x8x128xf32>
    %2 = arith.addf %0, %1 : vector<1x8x128xf32>
    %c0_5 = arith.constant 0 : index
    %c0_6 = arith.constant 0 : index
    %c0_7 = arith.constant 0 : index
    %3 = vector.load %arg4[%c0_5, %c0_6, %c0_7] : memref<1x8x128xf32, #tpu.memory_space<vmem>>, vector<1x8x128xf32>
    tpu.vector_store %arg4[%c0_5, %c0_6, %c0_7], %2 {strides = array<i32>} : memref<1x8x128xf32, #tpu.memory_space<vmem>>, vector<1x8x128xf32>,
    return
  }
  func.func @transform_0(%arg0: i32, %arg1: i32) -> (i32, i32, i32) {
    %c0_i32 = arith.constant 0 : i32
    %c0_i32_0 = arith.constant 0 : i32
    return %arg1, %arg0, %c0_i32 : i32, i32, i32
  }
  func.func @transform_1(%arg0: i32, %arg1: i32) -> (i32, i32, i32) {
    %c0_i32 = arith.constant 0 : i32
    %c0_i32_0 = arith.constant 0 : i32
    %c0_i32_1 = arith.constant 0 : i32
    return %c0_i32, %arg0, %c0_i32_0 : i32, i32, i32
  }
  func.func @transform_2(%arg0: i32, %arg1: i32) -> (i32, i32, i32) {
    %c0_i32 = arith.constant 0 : i32
    %c0_i32_0 = arith.constant 0 : i32
    return %arg1, %arg0, %c0_i32 : i32, i32, i32
  }
}

</mosaic_0001>

<llo_original>
// kernel: tpu_custom_call.1
$region0: #{tpu_custom_call.1}
  #allocation0 [shape = 'u32[]', space=smem, size = 0x4, offset = 0x4, fixed_abs, tag = 'smem constant byte address 0x4 - core index']
  #allocation1 [shape = 'u32[144,128]{1,0:T(1,128)}', space=vmem, size = 0x12000, scoped, tag = 'internal scratch']
  %s0 = inlined_call_operand.hbm [shape: f32[2,8,128], index: 0, kind: input, shape index: {}]
  %s1 = inlined_call_operand.hbm [shape: f32[1,8,128], index: 1, kind: input, shape index: {}]
  %s2 = inlined_call_operand.hbm [shape: f32[2,8,128], index: 2, kind: output, shape index: {}]
  %s3 = sld [smem:[#allocation0]]
  $region49: #{tpu_custom_call.1} parent=0
    _
  %s5 = ssub.s32 1, %s3
  %s6 = scalar_select 0, %s5, %s3
  $region1: #{tpu_custom_call.1} parent=0
    #allocation2 [shape = 'u8[8192]{0}', space=vmem, size = 0x2000, scoped, tag = 'input window, operand 0']
    #allocation3 [shape = 's32[2]{0}', space=sflag, size = 0x8, scoped, tag = 'scoped memory for tpu_custom_call.1']
    #allocation4 [shape = 's32[2]{0}', space=sflag, size = 0x8, scoped, tag = 'scoped memory for tpu_custom_call.1']
    #allocation5 [shape = 'u8[4096]{0}', space=vmem, size = 0x1000, scoped, tag = 'input window, operand 1, single buffered']
    #allocation6 [shape = 's32[1]{0}', space=sflag, size = 0x4, scoped, tag = 'scoped memory for tpu_custom_call.1']
    #allocation7 [shape = 'u8[8192]{0}', space=vmem, size = 0x2000, scoped, tag = 'output window, operand 0']
    %7 = vsyncpa [#allocation3], 0
    %s8 = scalar_lea.sflag [#allocation3], 1
    %9 = vsyncpa %s8, 0
    %10 = vsyncpa [#allocation6], 0
    %11 = vsyncpa [#allocation4], 0
    %s12 = scalar_lea.sflag [#allocation4], 1
    %13 = vsyncpa %s12, 0
    loop: start=0, step=1, limit=4
    $region2: #{tpu_custom_call.1} parent=1 // loop_pre_header
      _
    $region3: #{tpu_custom_call.1} parent=1 // loop_header
      %s15 = sphi 0, %s19
      %p16 = scmp.ge.s32.totalorder %s15, 4
      %s22 = sphi 0, %s34
      %s23 = sphi 0, %s30
      %s24 = sphi 0, %s22
      %s25 = sphi 0, %s23
      %s26 = sphi 0, %s24
      %s27 = sphi 0, %s25
      %s39 = sphi 0, %s41
      %s42 = sphi 0, %s39
      %s43 = sphi 0, %s42
      %s59 = sphi 0, %s43
      %s65 = sphi 0, %s67
      %s68 = sphi 0, %s65
      %s69 = sphi 0, %s68
      %s85 = sphi 0, %s69
      %s93 = sphi 0, %s95
      %s96 = sphi 0, %s93
      %s97 = sphi 0, %s96
      %s113 = sphi 0, %s97
    $region4: #{tpu_custom_call.1} parent=1 // loop_header_branch
      %18 = sbr.rel (%p16) target = $region8
    $region5: #{tpu_custom_call.1} parent=1 // loop_body
      %s20 = ssub.s32 %s15, 1
      %s21 = ssub.s32 %s15, 2
      %s28 = sadd.s32 1, %s23
      %p29 = scmp.ge.s32.totalorder %s28, 2
      %s30 = scalar_select %p29, 0, %s28
      %s31 = sadd.s32 1, %s22
      %s32 = scalar_select %p29, %s31, %s22
      %p33 = scmp.ge.s32.totalorder %s32, 1
      %s34 = scalar_select %p33, 0, %s32
      %s35 = ssub.s32 %s23, %s30
      %s36 = ssub.s32 %s22, %s34
      %s37 = sor.u32 %s35, %s36
      %p38 = scmp.eq.s32.totalorder %s37, 0
      %s40 = sadd.s32 %s39, 1
      %s41 = scalar_select %p38, %s39, %s40
      %p44 = pneg %p38
      %p45 = scmp.eq.s32.totalorder %s15, 1
      %p46 = por %p44, %p45
      %p47 = scmp.ne.s32.totalorder %s39, %s42
      %p48 = scmp.eq.s32.totalorder %s15, 0
      %p49 = por %p47, %p48
      %p50 = scmp.ne.s32.totalorder %s39, %s42
      %p51 = scmp.eq.s32.totalorder %s20, 1
      %p52 = por %p50, %p51
      %p53 = scmp.ne.s32.totalorder %s42, %s43
      %p54 = scmp.eq.s32.totalorder %s20, 0
      %p55 = por %p53, %p54
      %p56 = scmp.ne.s32.totalorder %s42, %s43
      %p57 = scmp.eq.s32.totalorder %s21, 1
      %p58 = por %p56, %p57
      %p60 = scmp.ne.s32.totalorder %s43, %s59
      %p61 = scmp.eq.s32.totalorder %s21, 0
      %p62 = por %p60, %p61
      %s63 = ssub.s32 %s22, %s34
      %p64 = scmp.eq.s32.totalorder %s63, 0
      %s66 = sadd.s32 %s65, 1
      %s67 = scalar_select %p64, %s65, %s66
      %p70 = pneg %p64
      %p71 = scmp.eq.s32.totalorder %s15, 1
      %p72 = por %p70, %p71
      %p73 = scmp.ne.s32.totalorder %s65, %s68
      %p74 = scmp.eq.s32.totalorder %s15, 0
      %p75 = por %p73, %p74
      %p76 = scmp.ne.s32.totalorder %s65, %s68
      %p77 = scmp.eq.s32.totalorder %s20, 1
      %p78 = por %p76, %p77
      %p79 = scmp.ne.s32.totalorder %s68, %s69
      %p80 = scmp.eq.s32.totalorder %s20, 0
      %p81 = por %p79, %p80
      %p82 = scmp.ne.s32.totalorder %s68, %s69
      %p83 = scmp.eq.s32.totalorder %s21, 1
      %p84 = por %p82, %p83
      %p86 = scmp.ne.s32.totalorder %s69, %s85
      %p87 = scmp.eq.s32.totalorder %s21, 0
      %p88 = por %p86, %p87
      %s89 = ssub.s32 %s23, %s30
      %s90 = ssub.s32 %s22, %s34
      %s91 = sor.u32 %s89, %s90
      %p92 = scmp.eq.s32.totalorder %s91, 0
      %s94 = sadd.s32 %s93, 1
      %s95 = scalar_select %p92, %s93, %s94
      %p98 = pneg %p92
      %p99 = scmp.eq.s32.totalorder %s15, 1
      %p100 = por %p98, %p99
      %p101 = scmp.ne.s32.totalorder %s93, %s96
      %p102 = scmp.eq.s32.totalorder %s15, 0
      %p103 = por %p101, %p102
      %p104 = scmp.ne.s32.totalorder %s93, %s96
      %p105 = scmp.eq.s32.totalorder %s20, 1
      %p106 = por %p104, %p105
      %p107 = scmp.ne.s32.totalorder %s96, %s97
      %p108 = scmp.eq.s32.totalorder %s20, 0
      %p109 = por %p107, %p108
      %p110 = scmp.ne.s32.totalorder %s96, %s97
      %p111 = scmp.eq.s32.totalorder %s21, 1
      %p112 = por %p110, %p111
      %p114 = scmp.ne.s32.totalorder %s97, %s113
      %p115 = scmp.eq.s32.totalorder %s21, 0
      %p116 = por %p114, %p115
      %p117 = scmp.le.s32.totalorder 1, %s15
      %p118 = scmp.lt.s32.totalorder %s15, 3
      %p119 = pnand %p117, %p118
      %p120 = pneg %p119
      // Predicated region
      $region9: #{tpu_custom_call.1} parent=5 // pred_check
        _
      $region10: #{tpu_custom_call.1} parent=5 // pred_check_branch
        %122 = sbr.rel (%p119) target = $region12
      $region11: #{tpu_custom_call.1} parent=5 // pred_region
        %s123 = ssub.s32 %s15, 1
        // Predicated region
        $region13: #{tpu_custom_call.1} parent=11 // pred_check
          %p124 = pneg %p81
        $region14: #{tpu_custom_call.1} parent=11 // pred_check_branch
          %126 = sbr.rel (%p124) target = $region16
        $region15: #{tpu_custom_call.1} parent=11 // pred_region
          %s128 = ssub.s32 128, 128
          %129 = vsyncadd [#allocation6], %s128
          %s130 = smul.addr %s24, 128
          %s131 = scalar_lea.hbm %s1, %s130
          %s133 = sshll.u32 [#allocation5], 4
          %s134 = int_to_ptr.vmem [resolvable:$true] %s133
          %136 = dma.hbm_to_vmem [thread:$0]  %s131, 128, %s134, [#allocation6]
        $region16: #{tpu_custom_call.1} parent=11 // pred_fallthru
          _
      $region12: #{tpu_custom_call.1} parent=5 // pred_fallthru
        _
      %p137 = scmp.lt.s32.totalorder %s15, 2
      // Predicated region
      $region17: #{tpu_custom_call.1} parent=5 // pred_check
        %p138 = pneg %p137
      $region18: #{tpu_custom_call.1} parent=5 // pred_check_branch
        %140 = sbr.rel (%p138) target = $region20
      $region19: #{tpu_custom_call.1} parent=5 // pred_region
        // Predicated region
        $region21: #{tpu_custom_call.1} parent=19 // pred_check
          %p141 = pneg %p49
        $region22: #{tpu_custom_call.1} parent=19 // pred_check_branch
          %143 = sbr.rel (%p141) target = $region24
        $region23: #{tpu_custom_call.1} parent=19 // pred_region
          %s144 = sand.u32 %s39, 1
          %s145 = scalar_lea.sflag [#allocation3], %s144
          %s146 = sand.u32 %s39, 1
          %s147 = smul.addr %s146, 8
          %s148 = scalar_lea.vmem [#allocation2], %s147
          %s150 = ssub.s32 128, 128
          %151 = vsyncadd %s145, %s150
          %s152 = sadd.s32 %s22, %s23
          %s153 = smul.addr %s152, 128
          %s154 = scalar_lea.hbm %s0, %s153
          %s156 = sshll.u32 %s148, 4
          %s157 = int_to_ptr.vmem [resolvable:$true] %s156
          %159 = dma.hbm_to_vmem [thread:$0]  %s154, 128, %s157, %s145
        $region24: #{tpu_custom_call.1} parent=19 // pred_fallthru
          _
      $region20: #{tpu_custom_call.1} parent=5 // pred_fallthru
        _
      %p160 = scmp.le.s32.totalorder 1, %s15
      %p161 = scmp.lt.s32.totalorder %s15, 3
      %p162 = pnand %p160, %p161
      %p163 = pneg %p162
      // Predicated region
      $region25: #{tpu_custom_call.1} parent=5 // pred_check
        _
      $region26: #{tpu_custom_call.1} parent=5 // pred_check_branch
        %165 = sbr.rel (%p162) target = $region28
      $region27: #{tpu_custom_call.1} parent=5 // pred_region
        %s166 = ssub.s32 %s15, 1
        %s167 = sand.u32 %s42, 1
        %s168 = scalar_lea.sflag [#allocation3], %s167
        %s169 = sand.u32 %s42, 1
        %s170 = smul.addr %s169, 8
        %s171 = scalar_lea.vmem [#allocation2], %s170
        // Predicated region
        $region29: #{tpu_custom_call.1} parent=27 // pred_check
          %p172 = pneg %p55
        $region30: #{tpu_custom_call.1} parent=27 // pred_check_branch
          %174 = sbr.rel (%p172) target = $region32
        $region31: #{tpu_custom_call.1} parent=27 // pred_region
          %175 = dma.done %s168, 128
        $region32: #{tpu_custom_call.1} parent=27 // pred_fallthru
          _
        // Predicated region
        $region33: #{tpu_custom_call.1} parent=27 // pred_check
          %p176 = pneg %p81
        $region34: #{tpu_custom_call.1} parent=27 // pred_check_branch
          %178 = sbr.rel (%p176) target = $region36
        $region35: #{tpu_custom_call.1} parent=27 // pred_region
          %179 = dma.done [#allocation6], 128
        $region36: #{tpu_custom_call.1} parent=27 // pred_fallthru
          _
        %s180 = sand.u32 %s42, 1
        %s181 = scalar_lea.sflag [#allocation3], %s180
        %s182 = sand.u32 %s42, 1
        %s183 = smul.addr %s182, 8
        %s184 = scalar_lea.vmem [#allocation2], %s183
        %p185 = pneg %p55
        %p186 = pneg %p52
        %p187 = pneg %p81
        %p188 = pneg %p78
        %p189 = pneg %p109
        %p190 = pneg %p106
        %s191 = sand.u32 %s96, 1
        %s192 = scalar_lea.sflag [#allocation4], %s191
        %s193 = sand.u32 %s96, 1
        %s194 = smul.addr %s193, 8
        %s195 = scalar_lea.vmem [#allocation7], %s194
        %v196 = vld [vmem:[%s171] sm:$0xff]
        %v197 = vld [vmem:[#allocation5] sm:$0xff]
        %v198 = vadd.f32 %v196, %v197
        %199 = vst [vmem:[%s195] sm:$0xff] %v198
        %s200 = sand.u32 %s96, 1
        %s201 = scalar_lea.sflag [#allocation4], %s200
        %s202 = sand.u32 %s96, 1
        %s203 = smul.addr %s202, 8
        %s204 = scalar_lea.vmem [#allocation7], %s203
        // Predicated region
        $region37: #{tpu_custom_call.1} parent=27 // pred_check
          %p205 = pneg %p106
        $region38: #{tpu_custom_call.1} parent=27 // pred_check_branch
          %207 = sbr.rel (%p205) target = $region40
        $region39: #{tpu_custom_call.1} parent=27 // pred_region
          %s209 = ssub.s32 128, 128
          %210 = vsyncadd %s201, %s209
          %s211 = sadd.s32 %s24, %s25
          %s212 = smul.addr %s211, 128
          %s213 = scalar_lea.hbm %s2, %s212
          %s215 = sshll.u32 %s204, 4
          %s216 = int_to_ptr.vmem [resolvable:$true] %s215
          %218 = dma.vmem_to_hbm [thread:$0]  %s216, 128, %s213, %s201
        $region40: #{tpu_custom_call.1} parent=27 // pred_fallthru
          _
      $region28: #{tpu_custom_call.1} parent=5 // pred_fallthru
        _
      %p219 = scmp.le.s32.totalorder 2, %s15
      // Predicated region
      $region41: #{tpu_custom_call.1} parent=5 // pred_check
        %p220 = pneg %p219
      $region42: #{tpu_custom_call.1} parent=5 // pred_check_branch
        %222 = sbr.rel (%p220) target = $region44
      $region43: #{tpu_custom_call.1} parent=5 // pred_region
        %s223 = ssub.s32 %s15, 2
        // Predicated region
        $region45: #{tpu_custom_call.1} parent=43 // pred_check
          %p224 = pneg %p112
        $region46: #{tpu_custom_call.1} parent=43 // pred_check_branch
          %226 = sbr.rel (%p224) target = $region48
        $region47: #{tpu_custom_call.1} parent=43 // pred_region
          %s227 = sand.u32 %s97, 1
          %s228 = scalar_lea.sflag [#allocation4], %s227
          %s229 = sand.u32 %s97, 1
          %s230 = smul.addr %s229, 8
          %s231 = scalar_lea.vmem [#allocation7], %s230
          %232 = dma.done %s228, 128
        $region48: #{tpu_custom_call.1} parent=43 // pred_fallthru
          _
      $region44: #{tpu_custom_call.1} parent=5 // pred_fallthru
        _
    $region6: #{tpu_custom_call.1} parent=1 // loop_footer
      %s19 = sadd.s32 1, %s15
    $region7: #{tpu_custom_call.1} parent=1 // loop_footer_branch
      %14 = sbr.rel target = $region3
    $region8: #{tpu_custom_call.1} parent=1 // loop_exit
      _
    %233 = vsyncpa [#allocation3], 1
    %s234 = scalar_lea.sflag [#allocation3], 1
    %235 = vsyncpa %s234, 1
    %236 = vsyncpa [#allocation6], 1
    %237 = vsyncpa [#allocation4], 1
    %s238 = scalar_lea.sflag [#allocation4], 1
    %239 = vsyncpa %s238, 1

</llo_original>
